<compile_context>
chip_gen: v5e
topology: v5e:2x2
jax: 0.10.0
libtpu: 0.0.40
codegen_flags: <defaults>
</compile_context>

<pallas_src>
import functools

import jax
import jax.numpy as jnp
from jax.experimental import pallas as pl
from jax.experimental.pallas import tpu as pltpu


def _round_up(x, m):
    return ((x + m - 1) // m) * m


def _vmem_capacity_bytes():
    """Physical VMEM per core for the current generation (fallback: 64 MiB)."""
    try:
        info = pltpu.get_tpu_info()
        cap = getattr(info, "vmem_capacity_bytes", None)
        if cap:
            return int(cap)
    except Exception:
        pass
    return 64 * 1024 * 1024  # conservative v7x floor


def _fused_mlp_kernel(x_ref, w_ref, b_ref, o_ref, act_ref, *,
                      num_layers, out_cols, weights_resident):
    """One grid step = (batch tile i, layer l).

    x_ref:   (tm, Dp)   padded input tile (read only at l == 0).
    w_ref:   resident: (L, Dp, Dp) full stack; streamed: (Dp, Dp) layer l.
             Layout is (in, out) so the matmul output is lane-dense.
    b_ref:   resident: (L, 1, Dp); streamed: (1, Dp).
    o_ref:   (tm, out_cols) output tile; written once, at the last layer.
    act_ref: (tm, Dp) f32 VMEM scratch holding the running activation.
    """
    l = pl.program_id(1)

    @pl.when(l == 0)
    def _():
        act_ref[...] = x_ref[...].astype(jnp.float32)

    if weights_resident:
        w = w_ref[l]          # (Dp, Dp), dynamic index along the layer axis
        b = b_ref[l]          # (1, Dp)
    else:
        w = w_ref[...]
        b = b_ref[...]

    # bf16 (or f32) operands into the MXU, f32 accumulation.
    y = jnp.dot(act_ref[...].astype(w.dtype), w,
                preferred_element_type=jnp.float32)
    # Bias-add / ReLU in f32 on the VPU (v5e VPU has no bf16).
    y = y + b.astype(jnp.float32)

    @pl.when(l < num_layers - 1)
    def _():
        # Hidden layer: ReLU (+ dropout p=0.0 -> identity).
        act_ref[...] = jnp.maximum(y, 0.0)

    @pl.when(l == num_layers - 1)
    def _():
        # Output layer: no ReLU; write only the lane-dense prefix that covers
        # out_dim (out_cols is a multiple of 128 -> unmasked vst).
        o_ref[...] = y[:, :out_cols].astype(o_ref.dtype)


def prepare_params(hidden_params, out_params, compute_dtype=jnp.bfloat16):
    """Pad + transpose + stack PyTorch-layout params ONCE (hoisted out of fwd).

    hidden_params: list of (w (out,in), b (out,)); out_params: (w, b).
    Weights are cast to `compute_dtype` (bf16 by default -> native MXU rate,
    half the DMA bytes); biases stay f32 (added in f32 on the VPU).
    Returns (w_stack (L, Dp, Dp), b_stack (L, 1, Dp), in_dim, out_dim).
    Zero padding propagates exactly through matmul + bias + ReLU.
    """
    layers = list(hidden_params) + [out_params]
    dims = [layers[0][0].shape[1]] + [w.shape[0] for (w, _) in layers]
    d_pad = _round_up(max(dims), 128)           # lane-dense everywhere
    num_layers = len(layers)

    w_stack = jnp.zeros((num_layers, d_pad, d_pad), compute_dtype)
    b_stack = jnp.zeros((num_layers, 1, d_pad), jnp.float32)
    for l, (w, b) in enumerate(layers):
        out_d, in_d = w.shape
        w_stack = w_stack.at[l, :in_d, :out_d].set(w.T.astype(compute_dtype))
        b_stack = b_stack.at[l, 0, :out_d].set(b.astype(jnp.float32))
    return w_stack, b_stack, dims[0], dims[-1]


def mlp_forward(x, w_stack, b_stack, in_dim, out_dim, *,
                block_m=512, force_streaming=False):
    """Fused Pallas MLP forward.  x: (batch, in_dim) -> (batch, out_dim)."""
    batch = x.shape[0]
    num_layers, d_pad, _ = w_stack.shape
    d_out_pad = _round_up(out_dim, 128)         # narrow, lane-dense output

    # Per-generation VMEM budget (leave headroom for compiler scratch).
    vmem_cap = _vmem_capacity_bytes()
    vmem_budget = int(vmem_cap * 0.85)

    # ---- batch tiling ------------------------------------------------------
    tm = min(block_m, _round_up(batch, 8))
    b_pad = _round_up(batch, tm)
    num_batch_tiles = b_pad // tm
    # v7x: make sure the "parallel" batch axis has >= 2 tiles to feed both TCs.
    if num_batch_tiles == 1 and tm >= 512:
        tm //= 2
        b_pad = _round_up(batch, tm)
        num_batch_tiles = b_pad // tm

    # ---- weight residency decision ----------------------------------------
    w_itemsize = jnp.dtype(w_stack.dtype).itemsize
    b_itemsize = jnp.dtype(b_stack.dtype).itemsize
    stack_bytes = num_layers * (d_pad * d_pad * w_itemsize + d_pad * b_itemsize)
    x_tile_bytes = tm * d_pad * 4
    out_tile_bytes = tm * d_out_pad * 4
    act_bytes = tm * d_pad * 4

    resident = (not force_streaming) and (2 * stack_bytes <= vmem_budget // 3)

    if resident:
        param_buf_bytes = 2 * stack_bytes               # conservative (2 bufs)
    else:
        param_buf_bytes = 2 * (d_pad * d_pad * w_itemsize + d_pad * b_itemsize)
    needed = param_buf_bytes + 2 * x_tile_bytes + 2 * out_tile_bytes + act_bytes

    vmem_limit = min(max(needed + needed // 2, 32 * 1024 * 1024), vmem_budget)
    vmem_limit = int(max(vmem_limit, needed))   # never clamp below footprint

    # ---- pad input ---------------------------------------------------------
    xp = jnp.zeros((b_pad, d_pad), jnp.float32).at[:batch, :in_dim].set(
        x.astype(jnp.float32))

    grid = (num_batch_tiles, num_layers)

    # ---- block specs -------------------------------------------------------
    if resident:
        # Constant block index -> fetched once, never re-DMA'd.
        w_spec = pl.BlockSpec((num_layers, d_pad, d_pad), lambda i, l: (0, 0, 0))
        b_spec = pl.BlockSpec((num_layers, 1, d_pad), lambda i, l: (0, 0, 0))
    else:
        # Stream one layer's weight/bias per grid step (auto double-buffered).
        w_spec = pl.BlockSpec((None, d_pad, d_pad), lambda i, l: (l, 0, 0))
        b_spec = pl.BlockSpec((None, 1, d_pad), lambda i, l: (l, 0, 0))

    w_hbm_reads = 1 if resident else num_batch_tiles
    cost = pl.CostEstimate(
        flops=2 * b_pad * d_pad * d_pad * num_layers,
        transcendentals=0,
        bytes_accessed=(xp.size * 4
                        + w_stack.size * w_itemsize * w_hbm_reads
                        + b_stack.size * b_itemsize * w_hbm_reads
                        + b_pad * d_out_pad * 4),
    )

    out_padded = pl.pallas_call(
        functools.partial(_fused_mlp_kernel,
                          num_layers=num_layers,
                          out_cols=d_out_pad,
                          weights_resident=resident),
        out_shape=jax.ShapeDtypeStruct((b_pad, d_out_pad), jnp.float32),
        grid_spec=pltpu.PrefetchScalarGridSpec(
            num_scalar_prefetch=0,
            grid=grid,
            in_specs=[
                pl.BlockSpec((tm, d_pad), lambda i, l: (i, 0)),
                w_spec,
                b_spec,
            ],
            out_specs=pl.BlockSpec((tm, d_out_pad), lambda i, l: (i, 0)),
            scratch_shapes=[pltpu.VMEM((tm, d_pad), jnp.float32)],
        ),
        compiler_params=pltpu.CompilerParams(
            dimension_semantics=("parallel", "arbitrary"),
            vmem_limit_bytes=vmem_limit,
        ),
        cost_estimate=cost,
    )(xp, w_stack, b_stack)

    return out_padded[:batch, :out_dim].astype(x.dtype)


def init_mlp_params(key, in_dim, hidden_dims, out_dim, dtype=jnp.float32):
    """Deterministic init mirroring nn.Linear shapes (weight: (out, in))."""
    dims = [in_dim] + list(hidden_dims)
    params = []
    for i in range(len(dims) - 1):
        key, kw, kb = jax.random.split(key, 3)
        bound = 1.0 / jnp.sqrt(dims[i])
        w = jax.random.uniform(kw, (dims[i + 1], dims[i]), dtype, -bound, bound)
        b = jax.random.uniform(kb, (dims[i + 1],), dtype, -bound, bound)
        params.append((w, b))
    key, kw, kb = jax.random.split(key, 3)
    bound = 1.0 / jnp.sqrt(dims[-1])
    w_out = jax.random.uniform(kw, (out_dim, dims[-1]), dtype, -bound, bound)
    b_out = jax.random.uniform(kb, (out_dim,), dtype, -bound, bound)
    return params, (w_out, b_out)


def mlp_reference(x, hidden_params, out_params):
    """Pure-JAX reference (matches the PyTorch module with dropout p=0.0)."""
    for w, b in hidden_params:
        x = jnp.maximum(x @ w.T + b, 0.0)
    w_out, b_out = out_params
    return x @ w_out.T + b_out


if __name__ == "__main__":
    key = jax.random.PRNGKey(0)
    batch, in_dim, hidden_dims, out_dim = 2, 16, [32, 24], 8

    k_params, k_x = jax.random.split(key)
    hidden_params, out_params = init_mlp_params(
        k_params, in_dim, hidden_dims, out_dim)
    x = jax.random.normal(k_x, (batch, in_dim), jnp.float32)

    ref = mlp_reference(x, hidden_params, out_params)

    # --- bf16-weight, VMEM-resident weight stack (default fast path) -------
    w_bf16, b_st, in_d, out_d = prepare_params(
        hidden_params, out_params, compute_dtype=jnp.bfloat16)
    out_resident = jax.block_until_ready(
        mlp_forward(x, w_bf16, b_st, in_d, out_d))
    assert out_resident.shape == (batch, out_dim)
    assert jnp.allclose(out_resident, ref, atol=3e-2, rtol=3e-2)

    # --- streamed-weight fallback path (used when the stack won't fit VMEM) -
    out_streamed = jax.block_until_ready(
        mlp_forward(x, w_bf16, b_st, in_d, out_d, force_streaming=True))
    assert out_streamed.shape == (batch, out_dim)
    assert jnp.allclose(out_streamed, ref, atol=3e-2, rtol=3e-2)

    # --- f32 path for tight numerical parity with the reference -------------
    w_f32, b_f32, _, _ = prepare_params(
        hidden_params, out_params, compute_dtype=jnp.float32)
    out_f32 = jax.block_until_ready(mlp_forward(x, w_f32, b_f32, in_d, out_d))
    assert jnp.allclose(out_f32, ref, atol=1e-5, rtol=1e-5)

    print("KERNEL_OK")
</pallas_src>

<mosaic_0001>
module attributes {stable_mosaic.version = 11 : i64} {
  func.func @_fused_mlp_kernel(%arg0: i32, %arg1: i32, %arg2: memref<8x128xf32, #tpu.memory_space<vmem>>, %arg3: memref<3x128x128xbf16, #tpu.memory_space<vmem>>, %arg4: memref<3x1x128xf32, #tpu.memory_space<vmem>>, %arg5: memref<8x128xf32, #tpu.memory_space<vmem>>, %arg6: memref<8x128xf32, #tpu.memory_space<vmem>>) attributes {dimension_semantics = [#tpu.dimension_semantics<parallel>, #tpu.dimension_semantics<arbitrary>], iteration_bounds = array<i64: 1, 3>, scalar_prefetch = 0 : i64, scratch_operands = 1 : i64, tpu.core_type = #tpu.core_type<tc>, window_params = [{transform_indices = @transform_0, window_bounds = array<i64: 8, 128>}, {pipeline_mode = #tpu.pipeline_mode<synchronous>, transform_indices = @transform_1, window_bounds = array<i64: 3, 128, 128>}, {pipeline_mode = #tpu.pipeline_mode<synchronous>, transform_indices = @transform_2, window_bounds = array<i64: 3, 1, 128>}, {transform_indices = @transform_3, window_bounds = array<i64: 8, 128>}]} {
    %c0_i32 = arith.constant 0 : i32
    %0 = arith.cmpi eq, %arg1, %c0_i32 : i32
    %1 = arith.extui %0 : i1 to i32
    %c0_i32_0 = arith.constant 0 : i32
    %2 = arith.cmpi ne, %1, %c0_i32_0 : i32
    scf.if %2 {
      %c0_9 = arith.constant 0 : index
      %c0_10 = arith.constant 0 : index
      %20 = vector.load %arg2[%c0_9, %c0_10] : memref<8x128xf32, #tpu.memory_space<vmem>>, vector<8x128xf32>
      %c0_11 = arith.constant 0 : index
      %c0_12 = arith.constant 0 : index
      %21 = vector.load %arg6[%c0_11, %c0_12] : memref<8x128xf32, #tpu.memory_space<vmem>>, vector<8x128xf32>
      tpu.vector_store %arg6[%c0_11, %c0_12], %20 {strides = array<i32>} : memref<8x128xf32, #tpu.memory_space<vmem>>, vector<8x128xf32>,
    } else {
    }
    %3 = arith.index_cast %arg1 : i32 to index
    %c0 = arith.constant 0 : index
    %c0_1 = arith.constant 0 : index
    %4 = vector.load %arg3[%3, %c0, %c0_1] : memref<3x128x128xbf16, #tpu.memory_space<vmem>>, vector<1x128x128xbf16>
    %5 = vector.shape_cast %4 : vector<1x128x128xbf16> to vector<128x128xbf16>
    %6 = arith.index_cast %arg1 : i32 to index
    %c0_2 = arith.constant 0 : index
    %c0_3 = arith.constant 0 : index
    %7 = vector.load %arg4[%6, %c0_2, %c0_3] : memref<3x1x128xf32, #tpu.memory_space<vmem>>, vector<1x1x128xf32>
    %8 = vector.shape_cast %7 : vector<1x1x128xf32> to vector<1x128xf32>
    %c0_4 = arith.constant 0 : index
    %c0_5 = arith.constant 0 : index
    %9 = vector.load %arg6[%c0_4, %c0_5] : memref<8x128xf32, #tpu.memory_space<vmem>>, vector<8x128xf32>
    %10 = arith.truncf %9 : vector<8x128xf32> to vector<8x128xbf16>
    %cst = arith.constant dense<0.000000e+00> : vector<8x128xf32>
    %11 = tpu.matmul %10, %5, %cst {dimension_numbers = #tpu.dot_dimension_numbers<[1], [0], [0], [1], [0, 0, 1, 1], [], []>} : vector<8x128xbf16>, vector<128x128xbf16>, vector<8x128xf32> -> vector<8x128xf32>
    %12 = vector.broadcast %8 : vector<1x128xf32> to vector<8x128xf32>
    %13 = arith.addf %11, %12 : vector<8x128xf32>
    %c2_i32 = arith.constant 2 : i32
    %14 = arith.cmpi slt, %arg1, %c2_i32 : i32
    %15 = arith.extui %14 : i1 to i32
    %c0_i32_6 = arith.constant 0 : i32
    %16 = arith.cmpi ne, %15, %c0_i32_6 : i32
    scf.if %16 {
      %cst_9 = arith.constant 0.000000e+00 : f32
      %20 = vector.broadcast %cst_9 : f32 to vector<8x128xf32>
      %21 = arith.maximumf %13, %20 : vector<8x128xf32>
      %c0_10 = arith.constant 0 : index
      %c0_11 = arith.constant 0 : index
      %22 = vector.load %arg6[%c0_10, %c0_11] : memref<8x128xf32, #tpu.memory_space<vmem>>, vector<8x128xf32>
      tpu.vector_store %arg6[%c0_10, %c0_11], %21 {strides = array<i32>} : memref<8x128xf32, #tpu.memory_space<vmem>>, vector<8x128xf32>,
    } else {
    }
    %c2_i32_7 = arith.constant 2 : i32
    %17 = arith.cmpi eq, %arg1, %c2_i32_7 : i32
    %18 = arith.extui %17 : i1 to i32
    %c0_i32_8 = arith.constant 0 : i32
    %19 = arith.cmpi ne, %18, %c0_i32_8 : i32
    scf.if %19 {
      %c0_9 = arith.constant 0 : index
      %c0_10 = arith.constant 0 : index
      %20 = vector.load %arg5[%c0_9, %c0_10] : memref<8x128xf32, #tpu.memory_space<vmem>>, vector<8x128xf32>
      tpu.vector_store %arg5[%c0_9, %c0_10], %13 {strides = array<i32>} : memref<8x128xf32, #tpu.memory_space<vmem>>, vector<8x128xf32>,
    } else {
    }
    return
  }
  func.func @transform_0(%arg0: i32, %arg1: i32) -> (i32, i32) {
    %c0_i32 = arith.constant 0 : i32
    %c0_i32_0 = arith.constant 0 : i32
    return %arg0, %c0_i32 : i32, i32
  }
  func.func @transform_1(%arg0: i32, %arg1: i32) -> (i32, i32, i32) {
    %c0_i32 = arith.constant 0 : i32
    %c0_i32_0 = arith.constant 0 : i32
    %c0_i32_1 = arith.constant 0 : i32
    %c0_i32_2 = arith.constant 0 : i32
    return %c0_i32, %c0_i32_0, %c0_i32_1 : i32, i32, i32
  }
  func.func @transform_2(%arg0: i32, %arg1: i32) -> (i32, i32, i32) {
    %c0_i32 = arith.constant 0 : i32
    %c0_i32_0 = arith.constant 0 : i32
    %c0_i32_1 = arith.constant 0 : i32
    %c0_i32_2 = arith.constant 0 : i32
    return %c0_i32, %c0_i32_0, %c0_i32_1 : i32, i32, i32
  }
  func.func @transform_3(%arg0: i32, %arg1: i32) -> (i32, i32) {
    %c0_i32 = arith.constant 0 : i32
    %c0_i32_0 = arith.constant 0 : i32
    return %arg0, %c0_i32 : i32, i32
  }
}

</mosaic_0001>

<llo_original>
// kernel: tpu_custom_call.1
$region0: #{tpu_custom_call.1}
  #allocation0 [shape = 'u32[]', space=smem, size = 0x4, offset = 0x4, fixed_abs, tag = 'smem constant byte address 0x4 - core index']
  #allocation1 [shape = 'u32[72,128]{1,0:T(1,128)}', space=vmem, size = 0x9000, scoped, tag = 'internal scratch']
  #allocation2 [shape = 'f32[8,128]{1,0:T(8,128)}', space=vmem, size = 0x1000, scoped, tag = 'scratch operand']
  %s0 = inlined_call_operand.hbm [shape: f32[8,128], index: 0, kind: input, shape index: {}]
  %s1 = inlined_call_operand.hbm [shape: bf16[3,128,128], index: 1, kind: input, shape index: {}]
  %s2 = inlined_call_operand.hbm [shape: f32[3,1,128], index: 2, kind: input, shape index: {}]
  %s3 = inlined_call_operand.hbm [shape: f32[8,128], index: 3, kind: output, shape index: {}]
  %s4 = sld [smem:[#allocation0]]
  $region69: #{tpu_custom_call.1} parent=0
    _
  %s6 = ssub.s32 1, %s4
  %s7 = scalar_select 0, %s6, %s4
  $region1: #{tpu_custom_call.1} parent=0
    #allocation3 [shape = 'u8[4096]{0}', space=vmem, size = 0x1000, scoped, tag = 'input window, operand 0, single buffered']
    #allocation4 [shape = 's32[2]{0}', space=sflag, size = 0x8, scoped, tag = 'scoped memory for tpu_custom_call.1']
    #allocation5 [shape = 's32[2]{0}', space=sflag, size = 0x8, scoped, tag = 'scoped memory for tpu_custom_call.1']
    #allocation6 [shape = 'u8[98304]{0}', space=vmem, size = 0x18000, scoped, tag = 'input window, operand 1, single buffered']
    #allocation7 [shape = 's32[1]{0}', space=sflag, size = 0x4, scoped, tag = 'scoped memory for tpu_custom_call.1']
    #allocation8 [shape = 'u8[1536]{0}', space=vmem, size = 0x800, scoped, tag = 'input window, operand 2, single buffered']
    #allocation9 [shape = 'u8[4096]{0}', space=vmem, size = 0x1000, scoped, tag = 'output window, operand 0, single buffered']
    %8 = vsyncpa [#allocation4], 0
    %9 = vsyncpa [#allocation7], 0
    %10 = vsyncpa [#allocation5], 0
    loop: start=0, step=1, limit=5
    $region2: #{tpu_custom_call.1} parent=1 // loop_pre_header
      _
    $region3: #{tpu_custom_call.1} parent=1 // loop_header
      %s12 = sphi 0, %s16
      %p13 = scmp.ge.s32.totalorder %s12, 5
      %s19 = sphi 0, %s31
      %s20 = sphi 0, %s27
      %s21 = sphi 0, %s19
      %s22 = sphi 0, %s20
      %s23 = sphi 0, %s21
      %s24 = sphi 0, %s22
      %s34 = sphi 0, %s36
      %s37 = sphi 0, %s34
      %s38 = sphi 0, %s37
      %s54 = sphi 0, %s38
      %s58 = sphi 0, %s58
      %s60 = sphi 0, %s58
      %s61 = sphi 0, %s60
      %s75 = sphi 0, %s61
      %s79 = sphi 0, %s79
      %s81 = sphi 0, %s79
      %s82 = sphi 0, %s81
      %s96 = sphi 0, %s82
      %s102 = sphi 0, %s104
      %s105 = sphi 0, %s102
      %s106 = sphi 0, %s105
      %s122 = sphi 0, %s106
    $region4: #{tpu_custom_call.1} parent=1 // loop_header_branch
      %15 = sbr.rel (%p13) target = $region8
    $region5: #{tpu_custom_call.1} parent=1 // loop_body
      %s17 = ssub.s32 %s12, 1
      %s18 = ssub.s32 %s12, 2
      %s25 = sadd.s32 1, %s20
      %p26 = scmp.ge.s32.totalorder %s25, 3
      %s27 = scalar_select %p26, 0, %s25
      %s28 = sadd.s32 1, %s19
      %s29 = scalar_select %p26, %s28, %s19
      %p30 = scmp.ge.s32.totalorder %s29, 1
      %s31 = scalar_select %p30, 0, %s29
      %s32 = ssub.s32 %s19, %s31
      %p33 = scmp.eq.s32.totalorder %s32, 0
      %s35 = sadd.s32 %s34, 1
      %s36 = scalar_select %p33, %s34, %s35
      %p39 = pneg %p33
      %p40 = scmp.eq.s32.totalorder %s12, 2
      %p41 = por %p39, %p40
      %p42 = scmp.ne.s32.totalorder %s34, %s37
      %p43 = scmp.eq.s32.totalorder %s12, 0
      %p44 = por %p42, %p43
      %p45 = scmp.ne.s32.totalorder %s34, %s37
      %p46 = scmp.eq.s32.totalorder %s17, 2
      %p47 = por %p45, %p46
      %p48 = scmp.ne.s32.totalorder %s37, %s38
      %p49 = scmp.eq.s32.totalorder %s17, 0
      %p50 = por %p48, %p49
      %p51 = scmp.ne.s32.totalorder %s37, %s38
      %p52 = scmp.eq.s32.totalorder %s18, 2
      %p53 = por %p51, %p52
      %p55 = scmp.ne.s32.totalorder %s38, %s54
      %p56 = scmp.eq.s32.totalorder %s18, 0
      %p57 = por %p55, %p56
      %s59 = sadd.s32 %s58, 1
      %p62 = scmp.eq.s32.totalorder %s12, 2
      %p63 = scmp.ne.s32.totalorder %s58, %s60
      %p64 = scmp.eq.s32.totalorder %s12, 0
      %p65 = por %p63, %p64
      %p66 = scmp.ne.s32.totalorder %s58, %s60
      %p67 = scmp.eq.s32.totalorder %s17, 2
      %p68 = por %p66, %p67
      %p69 = scmp.ne.s32.totalorder %s60, %s61
      %p70 = scmp.eq.s32.totalorder %s17, 0
      %p71 = por %p69, %p70
      %p72 = scmp.ne.s32.totalorder %s60, %s61
      %p73 = scmp.eq.s32.totalorder %s18, 2
      %p74 = por %p72, %p73
      %p76 = scmp.ne.s32.totalorder %s61, %s75
      %p77 = scmp.eq.s32.totalorder %s18, 0
      %p78 = por %p76, %p77
      %s80 = sadd.s32 %s79, 1
      %p83 = scmp.eq.s32.totalorder %s12, 2
      %p84 = scmp.ne.s32.totalorder %s79, %s81
      %p85 = scmp.eq.s32.totalorder %s12, 0
      %p86 = por %p84, %p85
      %p87 = scmp.ne.s32.totalorder %s79, %s81
      %p88 = scmp.eq.s32.totalorder %s17, 2
      %p89 = por %p87, %p88
      %p90 = scmp.ne.s32.totalorder %s81, %s82
      %p91 = scmp.eq.s32.totalorder %s17, 0
      %p92 = por %p90, %p91
      %p93 = scmp.ne.s32.totalorder %s81, %s82
      %p94 = scmp.eq.s32.totalorder %s18, 2
      %p95 = por %p93, %p94
      %p97 = scmp.ne.s32.totalorder %s82, %s96
      %p98 = scmp.eq.s32.totalorder %s18, 0
      %p99 = por %p97, %p98
      %s100 = ssub.s32 %s19, %s31
      %p101 = scmp.eq.s32.totalorder %s100, 0
      %s103 = sadd.s32 %s102, 1
      %s104 = scalar_select %p101, %s102, %s103
      %p107 = pneg %p101
      %p108 = scmp.eq.s32.totalorder %s12, 2
      %p109 = por %p107, %p108
      %p110 = scmp.ne.s32.totalorder %s102, %s105
      %p111 = scmp.eq.s32.totalorder %s12, 0
      %p112 = por %p110, %p111
      %p113 = scmp.ne.s32.totalorder %s102, %s105
      %p114 = scmp.eq.s32.totalorder %s17, 2
      %p115 = por %p113, %p114
      %p116 = scmp.ne.s32.totalorder %s105, %s106
      %p117 = scmp.eq.s32.totalorder %s17, 0
      %p118 = por %p116, %p117
      %p119 = scmp.ne.s32.totalorder %s105, %s106
      %p120 = scmp.eq.s32.totalorder %s18, 2
      %p121 = por %p119, %p120
      %p123 = scmp.ne.s32.totalorder %s106, %s122
      %p124 = scmp.eq.s32.totalorder %s18, 0
      %p125 = por %p123, %p124
      %p126 = scmp.le.s32.totalorder 1, %s12
      %p127 = scmp.lt.s32.totalorder %s12, 4
      %p128 = pnand %p126, %p127
      %p129 = pneg %p128
      // Predicated region
      $region9: #{tpu_custom_call.1} parent=5 // pred_check
        _
      $region10: #{tpu_custom_call.1} parent=5 // pred_check_branch
        %131 = sbr.rel (%p128) target = $region12
      $region11: #{tpu_custom_call.1} parent=5 // pred_region
        %s132 = ssub.s32 %s12, 1
        // Predicated region
        $region13: #{tpu_custom_call.1} parent=11 // pred_check
          %p133 = pneg %p50
        $region14: #{tpu_custom_call.1} parent=11 // pred_check_branch
          %135 = sbr.rel (%p133) target = $region16
        $region15: #{tpu_custom_call.1} parent=11 // pred_region
          %137 = vsyncadd [#allocation4], 0
          %s138 = smul.addr %s21, 8
          %s139 = scalar_lea.hbm %s0, %s138
          %s141 = sshll.u32 %s139, 4
          %s142 = int_to_ptr.hbm [resolvable:$true] %s141
          %s143 = sshll.u32 [#allocation3], 4
          %s144 = int_to_ptr.vmem [resolvable:$true] %s143
          %146 = dma.hbm_to_vmem [thread:$0]  %s142, 128, %s144, [#allocation4]
        $region16: #{tpu_custom_call.1} parent=11 // pred_fallthru
          _
        // Predicated region
        $region17: #{tpu_custom_call.1} parent=11 // pred_check
          %p147 = pneg %p71
        $region18: #{tpu_custom_call.1} parent=11 // pred_check_branch
          %149 = sbr.rel (%p147) target = $region20
        $region19: #{tpu_custom_call.1} parent=11 // pred_region
          %151 = vsyncadd [#allocation7], 0
          %s152 = sshll.u32 %s1, 4
          %s153 = int_to_ptr.hbm [resolvable:$true] %s152
          %s154 = sshll.u32 [#allocation6], 4
          %s155 = int_to_ptr.vmem [resolvable:$true] %s154
          %160 = dma.hbm_to_vmem [thread:$0]  %s153, 3072, %s155, [#allocation7], 64, 64, 4
        $region20: #{tpu_custom_call.1} parent=11 // pred_fallthru
          _
        // Predicated region
        $region21: #{tpu_custom_call.1} parent=11 // pred_check
          %p161 = pneg %p92
        $region22: #{tpu_custom_call.1} parent=11 // pred_check_branch
          %163 = sbr.rel (%p161) target = $region24
        $region23: #{tpu_custom_call.1} parent=11 // pred_region
          %165 = vsyncadd [#allocation7], 0
          %s166 = sshll.u32 %s2, 4
          %s167 = int_to_ptr.hbm [resolvable:$true] %s166
          %s168 = sshll.u32 [#allocation8], 4
          %s169 = int_to_ptr.vmem [resolvable:$true] %s168
          %174 = dma.hbm_to_vmem [thread:$0]  %s167, 48, %s169, [#allocation7], 16, 16, 1
        $region24: #{tpu_custom_call.1} parent=11 // pred_fallthru
          _
      $region12: #{tpu_custom_call.1} parent=5 // pred_fallthru
        _
      %p175 = scmp.lt.s32.totalorder %s12, 3
      // Predicated region
      $region25: #{tpu_custom_call.1} parent=5 // pred_check
        %p176 = pneg %p175
      $region26: #{tpu_custom_call.1} parent=5 // pred_check_branch
        %178 = sbr.rel (%p176) target = $region28
      $region27: #{tpu_custom_call.1} parent=5 // pred_region
        _
      $region28: #{tpu_custom_call.1} parent=5 // pred_fallthru
        _
      %p179 = scmp.le.s32.totalorder 1, %s12
      %p180 = scmp.lt.s32.totalorder %s12, 4
      %p181 = pnand %p179, %p180
      %p182 = pneg %p181
      // Predicated region
      $region29: #{tpu_custom_call.1} parent=5 // pred_check
        _
      $region30: #{tpu_custom_call.1} parent=5 // pred_check_branch
        %184 = sbr.rel (%p181) target = $region32
      $region31: #{tpu_custom_call.1} parent=5 // pred_region
        %s185 = ssub.s32 %s12, 1
        // Predicated region
        $region33: #{tpu_custom_call.1} parent=31 // pred_check
          %p186 = pneg %p50
        $region34: #{tpu_custom_call.1} parent=31 // pred_check_branch
          %188 = sbr.rel (%p186) target = $region36
        $region35: #{tpu_custom_call.1} parent=31 // pred_region
          %190 = dma.done [#allocation4], 128
        $region36: #{tpu_custom_call.1} parent=31 // pred_fallthru
          _
        // Predicated region
        $region37: #{tpu_custom_call.1} parent=31 // pred_check
          %p191 = pneg %p71
        $region38: #{tpu_custom_call.1} parent=31 // pred_check_branch
          %193 = sbr.rel (%p191) target = $region40
        $region39: #{tpu_custom_call.1} parent=31 // pred_region
          %195 = dma.done [#allocation7], 3072
        $region40: #{tpu_custom_call.1} parent=31 // pred_fallthru
          _
        // Predicated region
        $region41: #{tpu_custom_call.1} parent=31 // pred_check
          %p196 = pneg %p92
        $region42: #{tpu_custom_call.1} parent=31 // pred_check_branch
          %198 = sbr.rel (%p196) target = $region44
        $region43: #{tpu_custom_call.1} parent=31 // pred_region
          %200 = dma.done [#allocation7], 48
        $region44: #{tpu_custom_call.1} parent=31 // pred_fallthru
          _
        %p201 = pneg %p50
        %p202 = pneg %p47
        %p203 = pneg %p71
        %p204 = pneg %p68
        %p205 = pneg %p92
        %p206 = pneg %p89
        %p207 = pneg %p118
        %p208 = pneg %p115
        %p209 = scmp.eq.s32.totalorder %s22, 0
        // Predicated region
        $region45: #{tpu_custom_call.1} parent=31 // pred_check
          %p210 = pneg %p209
        $region46: #{tpu_custom_call.1} parent=31 // pred_check_branch
          %212 = sbr.rel (%p210) target = $region48
        $region47: #{tpu_custom_call.1} parent=31 // pred_region
          %v213 = vld [vmem:[#allocation3] sm:$0xff]
          %214 = vst [vmem:[#allocation2] sm:$0xff] %v213
        $region48: #{tpu_custom_call.1} parent=31 // pred_fallthru
          _
        %s215 = smul.u32 %s22, 16
        %s216 = smul.addr %s215, 4
        %s217 = scalar_lea.vmem [#allocation6], %s216
        %v218 = vld [vmem:[%s217] sm:$0xf]
        %v219 = vld [vmem:[%s217 + $0x4] sm:$0xf]
        %v220 = vld [vmem:[%s217 + $0x8] sm:$0xf]
        %v221 = vld [vmem:[%s217 + $0xc] sm:$0xf]
        %v222 = vld [vmem:[%s217 + $0x10] sm:$0xf]
        %v223 = vld [vmem:[%s217 + $0x14] sm:$0xf]
        %v224 = vld [vmem:[%s217 + $0x18] sm:$0xf]
        %v225 = vld [vmem:[%s217 + $0x1c] sm:$0xf]
        %v226 = vld [vmem:[%s217 + $0x20] sm:$0xf]
        %v227 = vld [vmem:[%s217 + $0x24] sm:$0xf]
        %v228 = vld [vmem:[%s217 + $0x28] sm:$0xf]
        %v229 = vld [vmem:[%s217 + $0x2c] sm:$0xf]
        %v230 = vld [vmem:[%s217 + $0x30] sm:$0xf]
        %v231 = vld [vmem:[%s217 + $0x34] sm:$0xf]
        %v232 = vld [vmem:[%s217 + $0x38] sm:$0xf]
        %v233 = vld [vmem:[%s217 + $0x3c] sm:$0xf]
        %s234 = scalar_lea.vmem [#allocation8], %s22
        %v235 = vld [vmem:[%s234] sm:$0x1]
        %v236 = vld [vmem:[#allocation2] sm:$0xff]
        %v237 = vpack.c.bf16 %v236, %v236
        %v239 = vperm.slane %v235, 0
        %v257 = vunpack.c.l.b16 %v218
        %v258 = vunpack.c.l.b16 %v219
        %v259 = vunpack.c.l.b16 %v220
        %v260 = vunpack.c.l.b16 %v221
        %v261 = vunpack.c.l.b16 %v222
        %v262 = vunpack.c.l.b16 %v223
        %v263 = vunpack.c.l.b16 %v224
        %v264 = vunpack.c.l.b16 %v225
        %v265 = vunpack.c.l.b16 %v226
        %v266 = vunpack.c.l.b16 %v227
        %v267 = vunpack.c.l.b16 %v228
        %v268 = vunpack.c.l.b16 %v229
        %v269 = vunpack.c.l.b16 %v230
        %v270 = vunpack.c.l.b16 %v231
        %v271 = vunpack.c.l.b16 %v232
        %v272 = vunpack.c.l.b16 %v233
        %v273 = vpack.c.b16 %v258, %v257
        %v274 = vpack.c.b16 %v260, %v259
        %v275 = vpack.c.b16 %v262, %v261
        %v276 = vpack.c.b16 %v264, %v263
        %v277 = vpack.c.b16 %v266, %v265
        %v278 = vpack.c.b16 %v268, %v267
        %v279 = vpack.c.b16 %v270, %v269
        %v280 = vpack.c.b16 %v272, %v271
        %289 = vmatpush.bf16.msra.mxu0 %v280
        %290 = vmatpush.bf16.msra.mxu0 %v279
        %291 = vmatpush.bf16.msra.mxu0 %v278
        %292 = vmatpush.bf16.msra.mxu0 %v277
        %293 = vmatpush.bf16.msra.mxu0 %v276
        %294 = vmatpush.bf16.msra.mxu0 %v275
        %295 = vmatpush.bf16.msra.mxu0 %v274
        %296 = vmatpush.bf16.msra.mxu0 %v273
        %297 = vmatmul.bf16.gmra.mxu0 %v237
        %v298 = vpop.f32.mrf.mxu0
        %v299 = vadd.f32 %v239, %v298
        %v300 = vpop.f32.mrf.mxu0
        %301 = vdwg.mxu0
        %p302 = scmp.lt.s32.totalorder %s22, 2
        // Predicated region
        $region49: #{tpu_custom_call.1} parent=31 // pred_check
          %p303 = pneg %p302
        $region50: #{tpu_custom_call.1} parent=31 // pred_check_branch
          %305 = sbr.rel (%p303) target = $region52
        $region51: #{tpu_custom_call.1} parent=31 // pred_region
          %v306 = vmax.f32 %v299, 0.0
          %307 = vst [vmem:[#allocation2] sm:$0xff] %v306
        $region52: #{tpu_custom_call.1} parent=31 // pred_fallthru
          _
        %p308 = scmp.eq.s32.totalorder %s22, 2
        // Predicated region
        $region53: #{tpu_custom_call.1} parent=31 // pred_check
          %p309 = pneg %p308
        $region54: #{tpu_custom_call.1} parent=31 // pred_check_branch
          %311 = sbr.rel (%p309) target = $region56
        $region55: #{tpu_custom_call.1} parent=31 // pred_region
          %312 = vst [vmem:[#allocation9] sm:$0xff] %v299
        $region56: #{tpu_custom_call.1} parent=31 // pred_fallthru
          _
        // Predicated region
        $region57: #{tpu_custom_call.1} parent=31 // pred_check
          %p313 = pneg %p115
        $region58: #{tpu_custom_call.1} parent=31 // pred_check_branch
          %315 = sbr.rel (%p313) target = $region60
        $region59: #{tpu_custom_call.1} parent=31 // pred_region
          %317 = vsyncadd [#allocation5], 0
          %s318 = smul.addr %s21, 8
          %s319 = scalar_lea.hbm %s3, %s318
          %s321 = sshll.u32 [#allocation9], 4
          %s322 = int_to_ptr.vmem [resolvable:$true] %s321
          %s323 = sshll.u32 %s319, 4
          %s324 = int_to_ptr.hbm [resolvable:$true] %s323
          %326 = dma.vmem_to_hbm [thread:$0]  %s322, 128, %s324, [#allocation5]
        $region60: #{tpu_custom_call.1} parent=31 // pred_fallthru
          _
        // Predicated region
        $region61: #{tpu_custom_call.1} parent=31 // pred_check
          %p327 = pneg %p115
        $region62: #{tpu_custom_call.1} parent=31 // pred_check_branch
          %329 = sbr.rel (%p327) target = $region64
        $region63: #{tpu_custom_call.1} parent=31 // pred_region
          %331 = dma.done [#allocation5], 128
        $region64: #{tpu_custom_call.1} parent=31 // pred_fallthru
          _
      $region32: #{tpu_custom_call.1} parent=5 // pred_fallthru
        _
      %p332 = scmp.le.s32.totalorder 2, %s12
      // Predicated region
      $region65: #{tpu_custom_call.1} parent=5 // pred_check
        %p333 = pneg %p332
      $region66: #{tpu_custom_call.1} parent=5 // pred_check_branch
        %335 = sbr.rel (%p333) target = $region68
      $region67: #{tpu_custom_call.1} parent=5 // pred_region
        %s336 = ssub.s32 %s12, 2
      $region68: #{tpu_custom_call.1} parent=5 // pred_fallthru
        _
    $region6: #{tpu_custom_call.1} parent=1 // loop_footer
      %s16 = sadd.s32 1, %s12
    $region7: #{tpu_custom_call.1} parent=1 // loop_footer_branch
      %11 = sbr.rel target = $region3
    $region8: #{tpu_custom_call.1} parent=1 // loop_exit
      _
    %337 = vsyncpa [#allocation4], 1
    %s338 = scalar_lea.sflag [#allocation4], 1
    %339 = vsyncpa %s338, 1
    %340 = vsyncpa [#allocation7], 1
    %341 = vsyncpa [#allocation5], 1
    %s342 = scalar_lea.sflag [#allocation5], 1
    %343 = vsyncpa %s342, 1

</llo_original>
